<compile_context>
chip_gen: v6e
topology: v6e:2x2x1
jax: 0.10.0
libtpu: 0.0.40
codegen_flags: <defaults>
</compile_context>

<pallas_src>
import functools
import math

import jax
import jax.numpy as jnp
from jax import lax
from jax.experimental import pallas as pl
from jax.experimental.pallas import tpu as pltpu


def _round_up(x, m):
    return ((x + m - 1) // m) * m


def _cdiv(a, b):
    return (a + b - 1) // b


def _vmem_capacity_bytes():
    try:
        return int(pltpu.get_tpu_info().vmem_capacity_bytes)
    except Exception:
        return 64 * 2 ** 20  # conservative (v7x per-TensorCore)


def _plan_tiles(B, C, HW, *, target_bytes, tb_req=None, thw_req=None):
    """Pick (tb, n_bt, thw, n_kt). Blocks never exceed array dims; tb*C % 8 == 0."""
    tb_unit = 8 // math.gcd(8, C)

    # ---- spatial (lane) axis: derive the step count first so wasted lanes < 128/row.
    if HW <= 128:
        thw = HW                                   # full-dim lane block
    else:
        thw_cap = (HW // 128) * 128                # largest legal block <= HW
        if thw_req is not None:
            thw = min(thw_cap, max(128, (thw_req // 128) * 128))
        else:
            tb_nom = max(tb_unit, min(32, _round_up(B, tb_unit)))
            thw_target = max(512, (target_bytes // max(1, tb_nom * C * 4)) // 128 * 128)
            thw_target = min(thw_target, thw_cap)
            hw128 = _round_up(HW, 128)
            n_kt_est = max(1, _cdiv(hw128, thw_target))
            thw = min(thw_cap, _round_up(_cdiv(hw128, n_kt_est), 128))
    n_kt = _cdiv(HW, thw)

    # ---- batch (sublane) axis: cdiv-based split, fatter tiles when HW is small.
    if B < tb_unit:
        tb = B                                     # full-dim rows block (tb*C == B*C)
    elif tb_req is not None:
        tb = max(tb_unit, min((tb_req // tb_unit) * tb_unit, (B // tb_unit) * tb_unit))
    else:
        tb_fit = max(tb_unit, (target_bytes // max(1, C * thw * 4)) // tb_unit * tb_unit)
        tb_cap_rows = max(tb_unit, (1024 // max(1, C)) // tb_unit * tb_unit)
        tb_cap_b = max(tb_unit, (B // tb_unit) * tb_unit)
        if B >= 2 * tb_unit:   # keep >= 2 batch tiles so both v7x TCs get work
            tb_cap_split = max(tb_unit, _round_up(_cdiv(B, 2), tb_unit))
        else:
            tb_cap_split = tb_cap_b
        tb = min(tb_fit, tb_cap_rows, tb_cap_b, tb_cap_split)
    n_bt = _cdiv(B, tb)
    return tb, n_bt, thw, n_kt


def _rca_kernel(x_ref, w_ref, b_ref, costs_ref, out_ref, acc_ref, *,
                chans, hw, thw, total_rows, ragged_hw, ragged_rows):
    # x_ref:     (TB*C, THW) f32  streamed activation tile (row = b*C + c)
    # w_ref:     (TB*C, NCP) f32  classifier weight, pre-scaled by 1/HW, tiled TB times
    # b_ref:     (1, NCP)    f32  bias (-1e30 on padded class lanes)
    # costs_ref: (1, NCP)    f32  per-class RCA cost (0 on padded class lanes)
    # out_ref:   (1, TBL)    f32  per-example cost, lane-dense
    # acc_ref:   (TB*C, 1)   f32  scratch: per-(example, channel) spatial sum
    i = pl.program_id(0)
    k = pl.program_id(1)
    nk = pl.num_programs(1)

    @pl.when(k == 0)
    def _():
        acc_ref[...] = jnp.zeros_like(acc_ref)

    # --- streaming hot path: accumulate spatial partial sums (DMA-bound) ---
    x = x_ref[...]
    if ragged_hw:  # last spatial block is partial: zero out-of-range lanes
        col = lax.broadcasted_iota(jnp.int32, x.shape, 1) + k * thw
        x = jnp.where(col < hw, x, 0.0)
    acc_ref[...] += jnp.sum(x, axis=1, keepdims=True)

    # --- epilogue: classifier + argmax + cost lookup, once per batch tile ---
    @pl.when(k == nk - 1)
    def _():
        acc = acc_ref[...]                                   # (TB*C, 1)
        tbc = acc.shape[0]
        tb = tbc // chans
        ncp = costs_ref.shape[1]
        tbl = out_ref.shape[1]

        if ragged_rows:  # last batch tile is partial: zero garbage rows
            row = lax.broadcasted_iota(jnp.int32, (tbc, 1), 0) + i * tbc
            acc = jnp.where(row < total_rows, acc, 0.0)

        # logits[t, n] = sum_c acc[t*C + c] * w_scaled[c, n] + b[n]
        contrib = acc * w_ref[...]                           # (TB*C, NCP)
        grp = lax.broadcasted_iota(jnp.int32, (tb, tbc), 0)
        rr = lax.broadcasted_iota(jnp.int32, (tb, tbc), 1)
        gmat = ((rr >= grp * chans) & (rr < (grp + 1) * chans)).astype(jnp.float32)
        logits = jnp.dot(gmat, contrib,
                         preferred_element_type=jnp.float32) + b_ref[...]   # (TB, NCP)

        # torch.argmax(dim=1) semantics: first maximal index.
        mmax = jnp.max(logits, axis=1, keepdims=True)
        cls_iota = lax.broadcasted_iota(jnp.int32, (tb, ncp), 1)
        cls = jnp.min(jnp.where(logits == mmax, cls_iota, ncp),
                      axis=1, keepdims=True)                 # (TB, 1)

        # cost lookup via one-hot reduce (padded classes have cost 0).
        onehot = (cls_iota == cls).astype(jnp.float32)
        cost_ex = jnp.sum(onehot * costs_ref[...], axis=1, keepdims=True)   # (TB, 1)

        # place TB per-example costs lane-dense in the (1, TBL) output row.
        sub = lax.broadcasted_iota(jnp.int32, (tb, tbl), 0)
        lane = lax.broadcasted_iota(jnp.int32, (tb, tbl), 1)
        sel = (sub == lane).astype(jnp.float32)
        out_ref[...] = jnp.sum(cost_ex * sel, axis=0, keepdims=True)


@functools.partial(jax.jit, static_argnames=("tb", "thw", "vmem_limit_bytes"))
def rca_model_wrapped(x_nchw, w, b, costs, *, tb=None, thw=None, vmem_limit_bytes=None):
    """x_nchw: (B,C,H,W); w: (C,NC); b: (NC,); costs: (NC,) -> per-example cost (B,) f32."""
    B, C, H, W = x_nchw.shape
    Cw, NC = w.shape
    assert Cw == C
    HW = H * W
    NCP = _round_up(NC, 128)

    vmem_cap = _vmem_capacity_bytes()
    target_bytes = 8 * 2 ** 20 if vmem_cap > 96 * 2 ** 20 else 4 * 2 ** 20

    tb_, n_bt, thw_, n_kt = _plan_tiles(B, C, HW, target_bytes=target_bytes,
                                        tb_req=tb, thw_req=thw)
    tbc = tb_ * C
    TBL = _round_up(tb_, 128)

    tile_bytes = tbc * thw_ * 4
    if vmem_limit_bytes is None:
        vmem_limit_bytes = int(min(int(0.75 * vmem_cap),
                                   max(32 * 2 ** 20, 4 * tile_bytes + 16 * 2 ** 20)))

    # Free metadata reshape (no pad, no copy): rows = b*C + c.
    x2d = x_nchw.reshape(B * C, HW).astype(jnp.float32)

    # Tiny resident operands; fold the 1/HW pooling scale into w.
    w_scaled = w.astype(jnp.float32) / float(HW)
    w_pad = jnp.pad(w_scaled, ((0, 0), (0, NCP - NC)))
    w_tiled = jnp.tile(w_pad, (tb_, 1))                                  # (tbc, NCP)
    b_pad = jnp.pad(b.astype(jnp.float32), (0, NCP - NC),
                    constant_values=-1e30).reshape(1, NCP)               # pads never win
    costs_pad = jnp.pad(costs.astype(jnp.float32), (0, NCP - NC)).reshape(1, NCP)

    ragged_hw = (HW % thw_) != 0
    ragged_rows = (B % tb_) != 0

    kernel = functools.partial(
        _rca_kernel, chans=C, hw=HW, thw=thw_, total_rows=B * C,
        ragged_hw=ragged_hw, ragged_rows=ragged_rows)

    x_index_map = lambda i, k: (i, k)
    x_spec = pl.BlockSpec((tbc, thw_), x_index_map)
    if n_kt >= 4:
        try:  # third buffer hides DMA-completion jitter on long spatial loops
            x_spec = pl.BlockSpec((tbc, thw_), x_index_map,
                                  pipeline_mode=pl.Buffered(3))
        except Exception:
            pass

    out = pl.pallas_call(
        kernel,
        out_shape=jax.ShapeDtypeStruct((n_bt, TBL), jnp.float32),
        grid_spec=pltpu.PrefetchScalarGridSpec(
            num_scalar_prefetch=0,
            grid=(n_bt, n_kt),
            in_specs=[
                x_spec,                                              # streamed x
                pl.BlockSpec((tbc, NCP), lambda i, k: (0, 0)),       # resident w
                pl.BlockSpec((1, NCP), lambda i, k: (0, 0)),         # resident b
                pl.BlockSpec((1, NCP), lambda i, k: (0, 0)),         # resident costs
            ],
            out_specs=pl.BlockSpec((1, TBL), lambda i, k: (i, 0)),
            scratch_shapes=[pltpu.VMEM((tbc, 1), jnp.float32)],
        ),
        compiler_params=pltpu.CompilerParams(
            dimension_semantics=("parallel", "arbitrary"),
            vmem_limit_bytes=vmem_limit_bytes,
        ),
    )(x2d, w_tiled, b_pad, costs_pad)

    # strip lane pad (per batch tile) and batch-tile raggedness.
    return out[:, :tb_].reshape(n_bt * tb_)[:B]


def _reference(x_nchw, w, b, costs):
    pooled = jnp.mean(x_nchw, axis=(2, 3))             # (B, C)
    logits = pooled @ w + b                             # (B, NC)
    cls = jnp.argmax(logits, axis=1)                    # (B,)
    return costs[cls]


if __name__ == "__main__":
    key = jax.random.PRNGKey(0)
    B, C, H, W = 2, 4, 16, 16
    NUM_CLASSES = 8

    kx, kw, kb = jax.random.split(key, 3)
    x = jax.random.normal(kx, (B, C, H, W), dtype=jnp.float32)
    # Deterministic synthetic inner-model params (Linear(C -> NUM_CLASSES)).
    w = jax.random.normal(kw, (C, NUM_CLASSES), dtype=jnp.float32) * 0.1
    b = jax.random.normal(kb, (NUM_CLASSES,), dtype=jnp.float32) * 0.1
    # Deterministic synthetic RCA cost table (stands in for the pickle dict).
    costs = 1.0 + 0.5 * jnp.arange(NUM_CLASSES, dtype=jnp.float32)

    # thw=128 -> two spatial reduction steps (exercises the accumulator pipeline).
    out = rca_model_wrapped(x, w, b, costs, thw=128)
    jax.block_until_ready(out)
    ref = _reference(x, w, b, costs)
    assert out.shape == (B,)
    assert jnp.allclose(out, ref, atol=1e-5), (out, ref)

    # Second config: B=3 (ragged batch tile, n_bt=2) and 10x10 (HW=100, full-dim
    # lane block) — exercises the in-kernel edge masking with no padding copies.
    x2 = jax.random.normal(jax.random.PRNGKey(1), (3, 4, 10, 10), dtype=jnp.float32)
    out2 = rca_model_wrapped(x2, w, b, costs)
    jax.block_until_ready(out2)
    ref2 = _reference(x2, w, b, costs)
    assert out2.shape == (3,)
    assert jnp.allclose(out2, ref2, atol=1e-5), (out2, ref2)

    print("KERNEL_OK")
</pallas_src>

<mosaic_0001>
module attributes {stable_mosaic.version = 11 : i64} {
  func.func @_rca_kernel(%arg0: i32, %arg1: i32, %arg2: memref<8x128xf32, #tpu.memory_space<vmem>>, %arg3: memref<8x128xf32, #tpu.memory_space<vmem>>, %arg4: memref<1x128xf32, #tpu.memory_space<vmem>>, %arg5: memref<1x128xf32, #tpu.memory_space<vmem>>, %arg6: memref<1x128xf32, #tpu.memory_space<vmem>>, %arg7: memref<8x1xf32, #tpu.memory_space<vmem>>) attributes {dimension_semantics = [#tpu.dimension_semantics<parallel>, #tpu.dimension_semantics<arbitrary>], iteration_bounds = array<i64: 1, 2>, scalar_prefetch = 0 : i64, scratch_operands = 1 : i64, tpu.core_type = #tpu.core_type<tc>, window_params = [{transform_indices = @transform_0, window_bounds = array<i64: 8, 128>}, {pipeline_mode = #tpu.pipeline_mode<synchronous>, transform_indices = @transform_1, window_bounds = array<i64: 8, 128>}, {pipeline_mode = #tpu.pipeline_mode<synchronous>, transform_indices = @transform_2, window_bounds = array<i64: 1, 128>}, {pipeline_mode = #tpu.pipeline_mode<synchronous>, transform_indices = @transform_3, window_bounds = array<i64: 1, 128>}, {transform_indices = @transform_4, window_bounds = array<i64: 1, 128>}]} {
    %c0_i32 = arith.constant 0 : i32
    %0 = arith.cmpi eq, %arg1, %c0_i32 : i32
    %1 = arith.extui %0 : i1 to i32
    %c0_i32_0 = arith.constant 0 : i32
    %2 = arith.cmpi ne, %1, %c0_i32_0 : i32
    scf.if %2 {
      %cst_7 = arith.constant 0.000000e+00 : f32
      %12 = vector.broadcast %cst_7 : f32 to vector<8x1xf32>
      %c0_8 = arith.constant 0 : index
      %c0_9 = arith.constant 0 : index
      %13 = vector.load %arg7[%c0_8, %c0_9] : memref<8x1xf32, #tpu.memory_space<vmem>>, vector<8x1xf32>
      tpu.vector_store %arg7[%c0_8, %c0_9], %12 {strides = array<i32>} : memref<8x1xf32, #tpu.memory_space<vmem>>, vector<8x1xf32>,
    } else {
    }
    %c0 = arith.constant 0 : index
    %c0_1 = arith.constant 0 : index
    %3 = vector.load %arg2[%c0, %c0_1] : memref<8x128xf32, #tpu.memory_space<vmem>>, vector<8x128xf32>
    %c0_2 = arith.constant 0 : index
    %c0_3 = arith.constant 0 : index
    %4 = vector.load %arg7[%c0_2, %c0_3] : memref<8x1xf32, #tpu.memory_space<vmem>>, vector<8x1xf32>
    %cst = arith.constant dense<0.000000e+00> : vector<8xf32>
    %5 = vector.multi_reduction <add>, %3, %cst [1] : vector<8x128xf32> to vector<8xf32>
    %6 = vector.shape_cast %5 : vector<8xf32> to vector<8x1xf32>
    %7 = arith.addf %4, %6 : vector<8x1xf32>
    %c0_4 = arith.constant 0 : index
    %c0_5 = arith.constant 0 : index
    %8 = vector.load %arg7[%c0_4, %c0_5] : memref<8x1xf32, #tpu.memory_space<vmem>>, vector<8x1xf32>
    tpu.vector_store %arg7[%c0_4, %c0_5], %7 {strides = array<i32>} : memref<8x1xf32, #tpu.memory_space<vmem>>, vector<8x1xf32>,
    %c1_i32 = arith.constant 1 : i32
    %9 = arith.cmpi eq, %arg1, %c1_i32 : i32
    %10 = arith.extui %9 : i1 to i32
    %c0_i32_6 = arith.constant 0 : i32
    %11 = arith.cmpi ne, %10, %c0_i32_6 : i32
    scf.if %11 {
      %c0_7 = arith.constant 0 : index
      %c0_8 = arith.constant 0 : index
      %12 = vector.load %arg7[%c0_7, %c0_8] : memref<8x1xf32, #tpu.memory_space<vmem>>, vector<8x1xf32>
      %c0_9 = arith.constant 0 : index
      %c0_10 = arith.constant 0 : index
      %13 = vector.load %arg3[%c0_9, %c0_10] : memref<8x128xf32, #tpu.memory_space<vmem>>, vector<8x128xf32>
      %14 = vector.broadcast %12 : vector<8x1xf32> to vector<8x128xf32>
      %15 = arith.mulf %14, %13 : vector<8x128xf32>
      %16 = tpu.iota {dimensions = array<i32: 0>} : vector<2x8xi32>
      %17 = tpu.iota {dimensions = array<i32: 1>} : vector<2x8xi32>
      %c4_i32 = arith.constant 4 : i32
      %18 = vector.broadcast %c4_i32 : i32 to vector<2x8xi32>
      %19 = arith.muli %16, %18 : vector<2x8xi32>
      %20 = arith.cmpi sge, %17, %19 : vector<2x8xi32>
      %c1_i32_11 = arith.constant 1 : i32
      %21 = vector.broadcast %c1_i32_11 : i32 to vector<2x8xi32>
      %22 = arith.addi %16, %21 : vector<2x8xi32>
      %c4_i32_12 = arith.constant 4 : i32
      %23 = vector.broadcast %c4_i32_12 : i32 to vector<2x8xi32>
      %24 = arith.muli %22, %23 : vector<2x8xi32>
      %25 = arith.cmpi slt, %17, %24 : vector<2x8xi32>
      %26 = arith.andi %20, %25 : vector<2x8xi1>
      %27 = arith.extui %26 : vector<2x8xi1> to vector<2x8xi32>
      %28 = arith.sitofp %27 : vector<2x8xi32> to vector<2x8xf32>
      %cst_13 = arith.constant dense<0.000000e+00> : vector<2x128xf32>
      %29 = tpu.matmul %28, %15, %cst_13 {dimension_numbers = #tpu.dot_dimension_numbers<[1], [0], [0], [1], [0, 0, 1, 1], [], []>} : vector<2x8xf32>, vector<8x128xf32>, vector<2x128xf32> -> vector<2x128xf32>
      %c0_14 = arith.constant 0 : index
      %c0_15 = arith.constant 0 : index
      %30 = vector.load %arg4[%c0_14, %c0_15] : memref<1x128xf32, #tpu.memory_space<vmem>>, vector<1x128xf32>
      %31 = vector.broadcast %30 : vector<1x128xf32> to vector<2x128xf32>
      %32 = arith.addf %29, %31 : vector<2x128xf32>
      %cst_16 = arith.constant dense<0xFF800000> : vector<2xf32>
      %33 = vector.multi_reduction <maximumf>, %32, %cst_16 [1] : vector<2x128xf32> to vector<2xf32>
      %34 = vector.shape_cast %33 : vector<2xf32> to vector<2x1xf32>
      %35 = tpu.iota {dimensions = array<i32: 1>} : vector<2x128xi32>
      %36 = vector.broadcast %34 : vector<2x1xf32> to vector<2x128xf32>
      %37 = arith.cmpf oeq, %32, %36 : vector<2x128xf32>
      %c128_i32 = arith.constant 128 : i32
      %38 = vector.broadcast %c128_i32 : i32 to vector<2x128xi32>
      %39 = arith.select %37, %35, %38 : vector<2x128xi1>, vector<2x128xi32>
      %cst_17 = arith.constant dense<2147483647> : vector<2xi32>
      %40 = vector.multi_reduction <minsi>, %39, %cst_17 [1] : vector<2x128xi32> to vector<2xi32>
      %41 = vector.shape_cast %40 : vector<2xi32> to vector<2x1xi32>
      %42 = vector.broadcast %41 : vector<2x1xi32> to vector<2x128xi32>
      %43 = arith.cmpi eq, %35, %42 : vector<2x128xi32>
      %44 = arith.extui %43 : vector<2x128xi1> to vector<2x128xi32>
      %45 = arith.sitofp %44 : vector<2x128xi32> to vector<2x128xf32>
      %c0_18 = arith.constant 0 : index
      %c0_19 = arith.constant 0 : index
      %46 = vector.load %arg5[%c0_18, %c0_19] : memref<1x128xf32, #tpu.memory_space<vmem>>, vector<1x128xf32>
      %47 = vector.broadcast %46 : vector<1x128xf32> to vector<2x128xf32>
      %48 = arith.mulf %45, %47 : vector<2x128xf32>
      %cst_20 = arith.constant dense<0.000000e+00> : vector<2xf32>
      %49 = vector.multi_reduction <add>, %48, %cst_20 [1] : vector<2x128xf32> to vector<2xf32>
      %50 = vector.shape_cast %49 : vector<2xf32> to vector<2x1xf32>
      %51 = tpu.iota {dimensions = array<i32: 0>} : vector<2x128xi32>
      %52 = tpu.iota {dimensions = array<i32: 1>} : vector<2x128xi32>
      %53 = arith.cmpi eq, %51, %52 : vector<2x128xi32>
      %54 = arith.extui %53 : vector<2x128xi1> to vector<2x128xi32>
      %55 = arith.sitofp %54 : vector<2x128xi32> to vector<2x128xf32>
      %56 = vector.broadcast %50 : vector<2x1xf32> to vector<2x128xf32>
      %57 = arith.mulf %56, %55 : vector<2x128xf32>
      %cst_21 = arith.constant dense<0.000000e+00> : vector<128xf32>
      %58 = vector.multi_reduction <add>, %57, %cst_21 [0] : vector<2x128xf32> to vector<128xf32>
      %59 = vector.shape_cast %58 : vector<128xf32> to vector<1x128xf32>
      %c0_22 = arith.constant 0 : index
      %c0_23 = arith.constant 0 : index
      %60 = vector.load %arg6[%c0_22, %c0_23] : memref<1x128xf32, #tpu.memory_space<vmem>>, vector<1x128xf32>
      tpu.vector_store %arg6[%c0_22, %c0_23], %59 {strides = array<i32>} : memref<1x128xf32, #tpu.memory_space<vmem>>, vector<1x128xf32>,
    } else {
    }
    return
  }
  func.func @transform_0(%arg0: i32, %arg1: i32) -> (i32, i32) {
    %c0_i32 = arith.constant 0 : i32
    return %arg0, %arg1 : i32, i32
  }
  func.func @transform_1(%arg0: i32, %arg1: i32) -> (i32, i32) {
    %c0_i32 = arith.constant 0 : i32
    %c0_i32_0 = arith.constant 0 : i32
    %c0_i32_1 = arith.constant 0 : i32
    return %c0_i32, %c0_i32_0 : i32, i32
  }
  func.func @transform_2(%arg0: i32, %arg1: i32) -> (i32, i32) {
    %c0_i32 = arith.constant 0 : i32
    %c0_i32_0 = arith.constant 0 : i32
    %c0_i32_1 = arith.constant 0 : i32
    return %c0_i32, %c0_i32_0 : i32, i32
  }
  func.func @transform_3(%arg0: i32, %arg1: i32) -> (i32, i32) {
    %c0_i32 = arith.constant 0 : i32
    %c0_i32_0 = arith.constant 0 : i32
    %c0_i32_1 = arith.constant 0 : i32
    return %c0_i32, %c0_i32_0 : i32, i32
  }
  func.func @transform_4(%arg0: i32, %arg1: i32) -> (i32, i32) {
    %c0_i32 = arith.constant 0 : i32
    %c0_i32_0 = arith.constant 0 : i32
    return %arg0, %c0_i32 : i32, i32
  }
}

</mosaic_0001>

<llo_original>
// kernel: rca_model_wrapped.1
$region0: #{rca_model_wrapped.1}
  #allocation0 [shape = 'u32[]', space=smem, size = 0x4, offset = 0x4, fixed_abs, tag = 'smem constant byte address 0x4 - core index']
  #allocation1 [shape = 'u32[144,128]{1,0:T(1,128)}', space=vmem, size = 0x12000, scoped, tag = 'internal scratch']
  #allocation2 [shape = 'f32[8,1]{1,0:T(8,128)}', space=vmem, size = 0x1000, scoped, tag = 'scratch operand']
  %s0 = inlined_call_operand.vmem [shape: f32[8,256], index: 0, kind: input, shape index: {}]
  %s1 = inlined_call_operand.vmem [shape: f32[8,128], index: 1, kind: input, shape index: {}]
  %s2 = inlined_call_operand.vmem [shape: f32[1,128], index: 2, kind: input, shape index: {}]
  %s3 = inlined_call_operand.vmem [shape: f32[1,128], index: 3, kind: input, shape index: {}]
  %s4 = inlined_call_operand.vmem [shape: f32[1,128], index: 4, kind: output, shape index: {}]
  %s5 = sld [smem:[#allocation0]]
  $region57: #{rca_model_wrapped.1} parent=0
    _
  %s7 = ssub.s32 1, %s5
  %s8 = scalar_select 0, %s7, %s5
  loop: start=0, step=1, limit=4
  $region2: #{rca_model_wrapped.1} parent=0 // loop_pre_header
    _
  $region3: #{rca_model_wrapped.1} parent=0 // loop_header
    %s10 = sphi 0, %s14
    %p11 = scmp.ge.s32.totalorder %s10, 4
    %s17 = sphi 0, %s29
    %s18 = sphi 0, %s25
    %s19 = sphi 0, %s17
    %s20 = sphi 0, %s18
    %s21 = sphi 0, %s19
    %s22 = sphi 0, %s20
    %s34 = sphi 0, %s36
    %s37 = sphi 0, %s34
    %s38 = sphi 0, %s37
    %s54 = sphi 0, %s38
    %s58 = sphi 0, %s58
    %s60 = sphi 0, %s58
    %s61 = sphi 0, %s60
    %s75 = sphi 0, %s61
    %s79 = sphi 0, %s79
    %s81 = sphi 0, %s79
    %s82 = sphi 0, %s81
    %s96 = sphi 0, %s82
    %s100 = sphi 0, %s100
    %s102 = sphi 0, %s100
    %s103 = sphi 0, %s102
    %s117 = sphi 0, %s103
    %s123 = sphi 0, %s125
    %s126 = sphi 0, %s123
    %s127 = sphi 0, %s126
    %s143 = sphi 0, %s127
  $region4: #{rca_model_wrapped.1} parent=0 // loop_header_branch
    %13 = sbr.rel (%p11) target = $region8
  $region5: #{rca_model_wrapped.1} parent=0 // loop_body
    %s15 = ssub.s32 %s10, 1
    %s16 = ssub.s32 %s10, 2
    %s23 = sadd.s32 1, %s18
    %p24 = scmp.ge.s32.totalorder %s23, 2
    %s25 = scalar_select %p24, 0, %s23
    %s26 = sadd.s32 1, %s17
    %s27 = scalar_select %p24, %s26, %s17
    %p28 = scmp.ge.s32.totalorder %s27, 1
    %s29 = scalar_select %p28, 0, %s27
    %s30 = ssub.s32 %s17, %s29
    %s31 = ssub.s32 %s18, %s25
    %s32 = sor.u32 %s30, %s31
    %p33 = scmp.eq.s32.totalorder %s32, 0
    %s35 = sadd.s32 %s34, 1
    %s36 = scalar_select %p33, %s34, %s35
    %p39 = pneg %p33
    %p40 = scmp.eq.s32.totalorder %s10, 1
    %p41 = por %p39, %p40
    %p42 = scmp.ne.s32.totalorder %s34, %s37
    %p43 = scmp.eq.s32.totalorder %s10, 0
    %p44 = por %p42, %p43
    %p45 = scmp.ne.s32.totalorder %s34, %s37
    %p46 = scmp.eq.s32.totalorder %s15, 1
    %p47 = por %p45, %p46
    %p48 = scmp.ne.s32.totalorder %s37, %s38
    %p49 = scmp.eq.s32.totalorder %s15, 0
    %p50 = por %p48, %p49
    %p51 = scmp.ne.s32.totalorder %s37, %s38
    %p52 = scmp.eq.s32.totalorder %s16, 1
    %p53 = por %p51, %p52
    %p55 = scmp.ne.s32.totalorder %s38, %s54
    %p56 = scmp.eq.s32.totalorder %s16, 0
    %p57 = por %p55, %p56
    %s59 = sadd.s32 %s58, 1
    %p62 = scmp.eq.s32.totalorder %s10, 1
    %p63 = scmp.ne.s32.totalorder %s58, %s60
    %p64 = scmp.eq.s32.totalorder %s10, 0
    %p65 = por %p63, %p64
    %p66 = scmp.ne.s32.totalorder %s58, %s60
    %p67 = scmp.eq.s32.totalorder %s15, 1
    %p68 = por %p66, %p67
    %p69 = scmp.ne.s32.totalorder %s60, %s61
    %p70 = scmp.eq.s32.totalorder %s15, 0
    %p71 = por %p69, %p70
    %p72 = scmp.ne.s32.totalorder %s60, %s61
    %p73 = scmp.eq.s32.totalorder %s16, 1
    %p74 = por %p72, %p73
    %p76 = scmp.ne.s32.totalorder %s61, %s75
    %p77 = scmp.eq.s32.totalorder %s16, 0
    %p78 = por %p76, %p77
    %s80 = sadd.s32 %s79, 1
    %p83 = scmp.eq.s32.totalorder %s10, 1
    %p84 = scmp.ne.s32.totalorder %s79, %s81
    %p85 = scmp.eq.s32.totalorder %s10, 0
    %p86 = por %p84, %p85
    %p87 = scmp.ne.s32.totalorder %s79, %s81
    %p88 = scmp.eq.s32.totalorder %s15, 1
    %p89 = por %p87, %p88
    %p90 = scmp.ne.s32.totalorder %s81, %s82
    %p91 = scmp.eq.s32.totalorder %s15, 0
    %p92 = por %p90, %p91
    %p93 = scmp.ne.s32.totalorder %s81, %s82
    %p94 = scmp.eq.s32.totalorder %s16, 1
    %p95 = por %p93, %p94
    %p97 = scmp.ne.s32.totalorder %s82, %s96
    %p98 = scmp.eq.s32.totalorder %s16, 0
    %p99 = por %p97, %p98
    %s101 = sadd.s32 %s100, 1
    %p104 = scmp.eq.s32.totalorder %s10, 1
    %p105 = scmp.ne.s32.totalorder %s100, %s102
    %p106 = scmp.eq.s32.totalorder %s10, 0
    %p107 = por %p105, %p106
    %p108 = scmp.ne.s32.totalorder %s100, %s102
    %p109 = scmp.eq.s32.totalorder %s15, 1
    %p110 = por %p108, %p109
    %p111 = scmp.ne.s32.totalorder %s102, %s103
    %p112 = scmp.eq.s32.totalorder %s15, 0
    %p113 = por %p111, %p112
    %p114 = scmp.ne.s32.totalorder %s102, %s103
    %p115 = scmp.eq.s32.totalorder %s16, 1
    %p116 = por %p114, %p115
    %p118 = scmp.ne.s32.totalorder %s103, %s117
    %p119 = scmp.eq.s32.totalorder %s16, 0
    %p120 = por %p118, %p119
    %s121 = ssub.s32 %s17, %s29
    %p122 = scmp.eq.s32.totalorder %s121, 0
    %s124 = sadd.s32 %s123, 1
    %s125 = scalar_select %p122, %s123, %s124
    %p128 = pneg %p122
    %p129 = scmp.eq.s32.totalorder %s10, 1
    %p130 = por %p128, %p129
    %p131 = scmp.ne.s32.totalorder %s123, %s126
    %p132 = scmp.eq.s32.totalorder %s10, 0
    %p133 = por %p131, %p132
    %p134 = scmp.ne.s32.totalorder %s123, %s126
    %p135 = scmp.eq.s32.totalorder %s15, 1
    %p136 = por %p134, %p135
    %p137 = scmp.ne.s32.totalorder %s126, %s127
    %p138 = scmp.eq.s32.totalorder %s15, 0
    %p139 = por %p137, %p138
    %p140 = scmp.ne.s32.totalorder %s126, %s127
    %p141 = scmp.eq.s32.totalorder %s16, 1
    %p142 = por %p140, %p141
    %p144 = scmp.ne.s32.totalorder %s127, %s143
    %p145 = scmp.eq.s32.totalorder %s16, 0
    %p146 = por %p144, %p145
    %p147 = scmp.le.s32.totalorder 1, %s10
    %p148 = scmp.lt.s32.totalorder %s10, 3
    %p149 = pnand %p147, %p148
    %p150 = pneg %p149
    // Predicated region
    $region9: #{rca_model_wrapped.1} parent=5 // pred_check
      _
    $region10: #{rca_model_wrapped.1} parent=5 // pred_check_branch
      %152 = sbr.rel (%p149) target = $region12
    $region11: #{rca_model_wrapped.1} parent=5 // pred_region
      %s153 = ssub.s32 %s10, 1
      // Predicated region
      $region13: #{rca_model_wrapped.1} parent=11 // pred_check
        %p154 = pneg %p71
      $region14: #{rca_model_wrapped.1} parent=11 // pred_check_branch
        %156 = sbr.rel (%p154) target = $region16
      $region15: #{rca_model_wrapped.1} parent=11 // pred_region
        _
      $region16: #{rca_model_wrapped.1} parent=11 // pred_fallthru
        _
      // Predicated region
      $region17: #{rca_model_wrapped.1} parent=11 // pred_check
        %p157 = pneg %p92
      $region18: #{rca_model_wrapped.1} parent=11 // pred_check_branch
        %159 = sbr.rel (%p157) target = $region20
      $region19: #{rca_model_wrapped.1} parent=11 // pred_region
        _
      $region20: #{rca_model_wrapped.1} parent=11 // pred_fallthru
        _
      // Predicated region
      $region21: #{rca_model_wrapped.1} parent=11 // pred_check
        %p160 = pneg %p113
      $region22: #{rca_model_wrapped.1} parent=11 // pred_check_branch
        %162 = sbr.rel (%p160) target = $region24
      $region23: #{rca_model_wrapped.1} parent=11 // pred_region
        _
      $region24: #{rca_model_wrapped.1} parent=11 // pred_fallthru
        _
    $region12: #{rca_model_wrapped.1} parent=5 // pred_fallthru
      _
    %p163 = scmp.lt.s32.totalorder %s10, 2
    // Predicated region
    $region25: #{rca_model_wrapped.1} parent=5 // pred_check
      %p164 = pneg %p163
    $region26: #{rca_model_wrapped.1} parent=5 // pred_check_branch
      %166 = sbr.rel (%p164) target = $region28
    $region27: #{rca_model_wrapped.1} parent=5 // pred_region
      // Predicated region
      $region29: #{rca_model_wrapped.1} parent=27 // pred_check
        %p167 = pneg %p44
      $region30: #{rca_model_wrapped.1} parent=27 // pred_check_branch
        %169 = sbr.rel (%p167) target = $region32
      $region31: #{rca_model_wrapped.1} parent=27 // pred_region
        %p170 = scmp.lt.s32.totalorder %s17, 0
        %s171 = scalar_select %p170, %s17, 0
        %p172 = scmp.lt.s32.totalorder %s18, 1
        %s173 = scalar_select %p172, %s18, 1
        %s174 = smul.addr %s171, 2
        %s175 = sadd.s32 %s173, %s174
        %s176 = smul.addr %s175, 8
        %s177 = scalar_lea.vmem %s0, %s176
      $region32: #{rca_model_wrapped.1} parent=27 // pred_fallthru
        _
    $region28: #{rca_model_wrapped.1} parent=5 // pred_fallthru
      _
    %p178 = scmp.le.s32.totalorder 1, %s10
    %p179 = scmp.lt.s32.totalorder %s10, 3
    %p180 = pnand %p178, %p179
    %p181 = pneg %p180
    // Predicated region
    $region33: #{rca_model_wrapped.1} parent=5 // pred_check
      _
    $region34: #{rca_model_wrapped.1} parent=5 // pred_check_branch
      %183 = sbr.rel (%p180) target = $region36
    $region35: #{rca_model_wrapped.1} parent=5 // pred_region
      %s184 = ssub.s32 %s10, 1
      %p185 = scmp.lt.s32.totalorder %s19, 0
      %s186 = scalar_select %p185, %s19, 0
      %p187 = scmp.lt.s32.totalorder %s20, 1
      %s188 = scalar_select %p187, %s20, 1
      %s189 = smul.addr %s186, 2
      %s190 = sadd.s32 %s188, %s189
      %s191 = smul.addr %s190, 8
      %s192 = scalar_lea.vmem %s0, %s191
      %p193 = pneg %p50
      %p194 = pneg %p47
      %p195 = pneg %p71
      %p196 = pneg %p68
      %p197 = pneg %p92
      %p198 = pneg %p89
      %p199 = pneg %p113
      %p200 = pneg %p110
      %p201 = pneg %p139
      %p202 = pneg %p136
      %p203 = scmp.lt.s32.totalorder %s19, 0
      %s204 = scalar_select %p203, %s19, 0
      %s205 = scalar_lea.vmem %s4, %s204
      %p206 = scmp.lt.s32.totalorder %s19, 0
      %s207 = scalar_select %p206, %s19, 0
      %p208 = scmp.lt.s32.totalorder %s20, 1
      %s209 = scalar_select %p208, %s20, 1
      %s210 = smul.addr %s207, 2
      %s211 = sadd.s32 %s209, %s210
      %s212 = smul.addr %s211, 8
      %s213 = scalar_lea.vmem %s0, %s212
      %p214 = scmp.lt.s32.totalorder %s19, 0
      %s215 = scalar_select %p214, %s19, 0
      %s216 = scalar_lea.vmem %s4, %s215
      %p217 = scmp.eq.s32.totalorder %s20, 0
      // Predicated region
      $region37: #{rca_model_wrapped.1} parent=35 // pred_check
        %p218 = pneg %p217
      $region38: #{rca_model_wrapped.1} parent=35 // pred_check_branch
        %220 = sbr.rel (%p218) target = $region40
      $region39: #{rca_model_wrapped.1} parent=35 // pred_region
        %vm221 = vcmask 7168
        %222 = vst.msk [vmem:[#allocation2] sm:$0xff] %vm221, 0.0
      $region40: #{rca_model_wrapped.1} parent=35 // pred_fallthru
        _
      %v223 = vld [vmem:[%s213] sm:$0xff]
      %v224 = vld [vmem:[#allocation2] sm:$0xff]
      %225 = vadd.xlane.f32.xlu0 %v223
      %v226 = vpop.xlane.xlu0 %225
      %v227 = vadd.f32 %v224, %v226
      %vm228 = vcmask 7168
      %229 = vst.msk [vmem:[#allocation2] sm:$0xff] %vm228, %v227
      %p230 = scmp.eq.s32.totalorder %s20, 1
      // Predicated region
      $region41: #{rca_model_wrapped.1} parent=35 // pred_check
        %p231 = pneg %p230
      $region42: #{rca_model_wrapped.1} parent=35 // pred_check_branch
        %233 = sbr.rel (%p231) target = $region44
      $region43: #{rca_model_wrapped.1} parent=35 // pred_region
        %v234 = vld [vmem:[#allocation2] sm:$0xff]
        %v235 = vld [vmem:[%s1] sm:$0xff]
        %237 = vset.pattern.permute.xlu0 0
        %238 = vperm.xlu0 %237, %v234
        %v239 = vpop.permute.xlu0 %238
        %v241 = vmul.f32 %v239, %v235
        %v242 = vlaneseq
        %v243 = vshrl.u32 %v242, 7
        %v244 = vlaneseq
        %v245 = vand.u32 %v244, 127
        %v246 = vmul.u32 %v243, 4
        %vm247 = vcmp.ge.s32.totalorder %v245, %v246
        %v248 = vadd.s32 %v243, 1
        %v249 = vmul.u32 %v248, 4
        %vm250 = vcmp.lt.s32.totalorder %v245, %v249
        %vm251 = vmand %vm247, %vm250
        %v252 = vsel %vm251, 1, 0
        %v253 = vcvt.s32.f32 %v252
        %v254 = vld [vmem:[%s2] sm:$0x1]
        %v256 = vlaneseq
        %v257 = vshrl.u32 %v256, 7
        %v258 = vsub.s32 0, %v257
        %v259 = vrot.slane %v254, %v258
        %vm261 = vcmask 64512
        %v263 = vsel %vm261, %v253, 0
        %265 = vmatprep.subr.mxu0 0.0
        %266 = vmatpush1.msra.mxu0 0.0
        %267 = vmatprep.subr.mxu0 0.0
        %268 = vmatpush1.msra.mxu0 0.0
        %269 = vmatprep.subr.mxu0 0.0
        %270 = vmatpush1.msra.mxu0 0.0
        %271 = vmatprep.subr.mxu0 0.0
        %272 = vmatpush1.msra.mxu0 0.0
        %273 = vmatprep.subr.mxu0 0.0
        %274 = vmatpush1.msra.mxu0 0.0
        %275 = vmatprep.subr.mxu0 0.0
        %276 = vmatpush1.msra.mxu0 0.0
        %277 = vmatprep.subr.mxu0 0.0
        %278 = vmatpush1.msra.mxu0 0.0
        %279 = vmatprep.subr.mxu0 0.0
        %280 = vmatpush1.msra.mxu0 0.0
        %281 = vmatprep.subr.mxu0 0.0
        %282 = vmatpush1.msra.mxu0 0.0
        %283 = vmatprep.subr.mxu0 0.0
        %284 = vmatpush1.msra.mxu0 0.0
        %285 = vmatprep.subr.mxu0 0.0
        %286 = vmatpush1.msra.mxu0 0.0
        %287 = vmatprep.subr.mxu0 0.0
        %288 = vmatpush1.msra.mxu0 0.0
        %289 = vmatprep.subr.mxu0 0.0
        %290 = vmatpush1.msra.mxu0 0.0
        %291 = vmatprep.subr.mxu0 0.0
        %292 = vmatpush1.msra.mxu0 0.0
        %293 = vmatprep.subr.mxu0 0.0
        %294 = vmatpush1.msra.mxu0 0.0
        %295 = vmatprep.subr.mxu0 0.0
        %296 = vmatpush1.msra.mxu0 %v241
        %297 = vmatprep.subr.mxu0 0.0
        %298 = vmatpush2.msra.mxu0 0.0
        %299 = vmatprep.subr.mxu0 0.0
        %300 = vmatpush2.msra.mxu0 0.0
        %301 = vmatprep.subr.mxu0 0.0
        %302 = vmatpush2.msra.mxu0 0.0
        %303 = vmatprep.subr.mxu0 0.0
        %304 = vmatpush2.msra.mxu0 0.0
        %305 = vmatprep.subr.mxu0 0.0
        %306 = vmatpush2.msra.mxu0 0.0
        %307 = vmatprep.subr.mxu0 0.0
        %308 = vmatpush2.msra.mxu0 0.0
        %309 = vmatprep.subr.mxu0 0.0
        %310 = vmatpush2.msra.mxu0 0.0
        %311 = vmatprep.subr.mxu0 0.0
        %312 = vmatpush2.msra.mxu0 0.0
        %313 = vmatprep.subr.mxu0 0.0
        %314 = vmatpush2.msra.mxu0 0.0
        %315 = vmatprep.subr.mxu0 0.0
        %316 = vmatpush2.msra.mxu0 0.0
        %317 = vmatprep.subr.mxu0 0.0
        %318 = vmatpush2.msra.mxu0 0.0
        %319 = vmatprep.subr.mxu0 0.0
        %320 = vmatpush2.msra.mxu0 0.0
        %321 = vmatprep.subr.mxu0 0.0
        %322 = vmatpush2.msra.mxu0 0.0
        %323 = vmatprep.subr.mxu0 0.0
        %324 = vmatpush2.msra.mxu0 0.0
        %325 = vmatprep.subr.mxu0 0.0
        %326 = vmatpush2.msra.mxu0 0.0
        %327 = vmatprep.subr.mxu0 0.0
        %328 = vmatpush2.msra.mxu0 0.0
        %329 = vmatprep.mubr.f32.mxu0 0.0
        %330 = vmatmul.mubr.f32.gmra.mxu0 %v263
        %v331 = vpop.f32.mrf.mxu0
        %v332 = vadd.f32 %v259, %v331
        %v333 = vpop.f32.mrf.mxu0
        %334 = vdwg.mxu0
        %vm335 = vcmask 1041408
        %v336 = vsel %vm335, %v332, -inf
        %337 = vmax.xlane.f32.xlu0 %v336
        %v338 = vpop.xlane.xlu0 %337
        %vm339 = vcmp.eq.f32.partialorder %v332, %v338
        %v340 = vsel %vm339, %v245, 128
        %v341 = vsel %vm335, %v340, 2147483647
        %v342 = vand.u32 %v341, 65535
        %v343 = vshra.s32 %v341, 16
        %v344 = vcvt.s32.f32 %v342
        %v345 = vcvt.s32.f32 %v343
        %346 = vmin.xlane.f32.xlu0 %v345
        %v347 = vpop.xlane.xlu0 %346
        %vm348 = vcmp.eq.f32.partialorder %v345, %v347
        %v349 = vsel %vm348, %v344, inf
        %350 = vmin.xlane.f32.xlu0 %v349
        %v351 = vpop.xlane.xlu0 %350
        %v352 = vcvt.f32.s32 %v351
        %v353 = vcvt.f32.s32 %v347
        %v354 = vshll.u32 %v353, 16
        %v355 = vadd.s32 %v354, %v352
        %vm356 = vcmp.eq.s32.totalorder %v245, %v355
        %v357 = vsel %vm356, 1, 0
        %v358 = vcvt.s32.f32 %v357
        %v359 = vld [vmem:[%s3] sm:$0x1]
        %v361 = vlaneseq
        %v362 = vshrl.u32 %v361, 7
        %v363 = vsub.s32 0, %v362
        %v364 = vrot.slane %v359, %v363
        %v366 = vmul.f32 %v358, %v364
        %v367 = vsel %vm335, %v366, 0.0
        %368 = vadd.xlane.f32.xlu0 %v367
        %v369 = vpop.xlane.xlu0 %368
        %vm370 = vcmp.eq.s32.totalorder %v243, %v245
        %v371 = vsel %vm370, 1, 0
        %v372 = vcvt.s32.f32 %v371
        %v373 = vmul.f32 %v369, %v372
        %v374 = vsel %vm335, %v373, 0.0
        %v375 = vrot.slane %v374, 4
        %v376 = vadd.f32 %v374, %v375
        %v377 = vrot.slane %v376, 2
        %v378 = vadd.f32 %v376, %v377
        %v379 = vrot.slane %v378, 1
        %v380 = vadd.f32 %v378, %v379
        %381 = vst [vmem:[%s216] sm:$0x1] %v380
      $region44: #{rca_model_wrapped.1} parent=35 // pred_fallthru
        _
      %p382 = scmp.lt.s32.totalorder %s19, 0
      %s383 = scalar_select %p382, %s19, 0
      %s384 = scalar_lea.vmem %s4, %s383
      // Predicated region
      $region45: #{rca_model_wrapped.1} parent=35 // pred_check
        %p385 = pneg %p136
      $region46: #{rca_model_wrapped.1} parent=35 // pred_check_branch
        %387 = sbr.rel (%p385) target = $region48
      $region47: #{rca_model_wrapped.1} parent=35 // pred_region
        _
      $region48: #{rca_model_wrapped.1} parent=35 // pred_fallthru
        _
      // Predicated region
      $region49: #{rca_model_wrapped.1} parent=35 // pred_check
        %p388 = pneg %p136
      $region50: #{rca_model_wrapped.1} parent=35 // pred_check_branch
        %390 = sbr.rel (%p388) target = $region52
      $region51: #{rca_model_wrapped.1} parent=35 // pred_region
        %p391 = scmp.lt.s32.totalorder %s19, 0
        %s392 = scalar_select %p391, %s19, 0
        %s393 = scalar_lea.vmem %s4, %s392
      $region52: #{rca_model_wrapped.1} parent=35 // pred_fallthru
        _
    $region36: #{rca_model_wrapped.1} parent=5 // pred_fallthru
      _
    %p394 = scmp.le.s32.totalorder 2, %s10
    // Predicated region
    $region53: #{rca_model_wrapped.1} parent=5 // pred_check
      %p395 = pneg %p394
    $region54: #{rca_model_wrapped.1} parent=5 // pred_check_branch
      %397 = sbr.rel (%p395) target = $region56
    $region55: #{rca_model_wrapped.1} parent=5 // pred_region
      %s398 = ssub.s32 %s10, 2
    $region56: #{rca_model_wrapped.1} parent=5 // pred_fallthru
      _
  $region6: #{rca_model_wrapped.1} parent=0 // loop_footer
    %s14 = sadd.s32 1, %s10
  $region7: #{rca_model_wrapped.1} parent=0 // loop_footer_branch
    %9 = sbr.rel target = $region3
  $region8: #{rca_model_wrapped.1} parent=0 // loop_exit
    _

</llo_original>
